<compile_context>
chip_gen: v6e
topology: v6e:2x2x1
jax: 0.10.0
libtpu: 0.0.40
codegen_flags: <defaults>
</compile_context>

<pallas_src>
import jax
import jax.numpy as jnp
from jax.experimental import pallas as pl
from jax.experimental.pallas import tpu as pltpu


def _round_up(a: int, b: int) -> int:
    return (a + b - 1) // b * b


def _linreg_kernel(x_ref, w_ref, o_ref):
    # x_ref: (D, TR, 128) f32 VMEM -- batch laid out (sublane, lane)-dense
    # w_ref: (D+1, 1)     f32 SMEM -- [linear weights ..., bias]
    # o_ref: (TR, 128)    f32 VMEM -- fully dense output tile
    d = x_ref.shape[0]
    acc = x_ref[0] * w_ref[0, 0] + w_ref[d, 0]
    for k in range(1, d):                      # D is small & static: unrolled VPU FMAs
        acc = acc + x_ref[k] * w_ref[k, 0]
    o_ref[...] = acc


def my_linear_regression_forward(x, w, *, tile_rows=None):
    """x: (N, D) f32, w: (D+1, 1) f32  ->  (N, 1) f32 predictions."""
    x = jnp.asarray(x, jnp.float32)
    w = jnp.asarray(w, jnp.float32)
    n, d = x.shape
    assert w.shape == (d + 1, 1), w.shape

    rows = -(-n // 128)                        # ceil(N / 128) sublane-rows of 128 lanes
    if tile_rows is not None:
        tr = max(8, _round_up(int(tile_rows), 8))
    else:
        # ~2 MiB of x per tile: double-buffered input + output stays well inside
        # even v5e's 16 MiB default scoped VMEM (and far under v6e/v7x limits).
        tr = max(8, ((2 * 1024 * 1024) // (4 * max(d, 1) * 128) // 8) * 8)
    if rows <= tr:
        tr = rows                              # single tile; full-extent block is legal
        rows_pad = rows
    else:
        rows_pad = _round_up(rows, tr)
    n_pad = rows_pad * 128

    xt = x.T                                   # (D, N); just a reshape when D == 1
    if n_pad != n:
        xt = jnp.pad(xt, ((0, 0), (0, n_pad - n)))
    x3 = xt.reshape(d, rows_pad, 128)          # batch on (sublane, lane)

    grid = (rows_pad // tr,)

    out = pl.pallas_call(
        _linreg_kernel,
        out_shape=jax.ShapeDtypeStruct((rows_pad, 128), jnp.float32),
        grid_spec=pltpu.PrefetchScalarGridSpec(
            num_scalar_prefetch=0,
            grid=grid,
            in_specs=[
                pl.BlockSpec((d, tr, 128), lambda i: (0, i, 0)),     # streamed x tiles
                pl.BlockSpec(memory_space=pltpu.MemorySpace.SMEM),   # weights + bias scalars
            ],
            out_specs=pl.BlockSpec((tr, 128), lambda i: (i, 0)),     # dense output tile
        ),
        compiler_params=pltpu.CompilerParams(
            dimension_semantics=("parallel",),   # v7x: shard row-tiles across 2 TensorCores
            vmem_limit_bytes=32 * 1024 * 1024,
        ),
    )(x3, w)

    # Undo the (rows, 128) packing; row i corresponds to y_pred[i] of the reference.
    return out.reshape(n_pad)[:n].reshape(n, 1)


if __name__ == "__main__":
    key = jax.random.PRNGKey(0)
    kx, kw, kx2, kw2 = jax.random.split(key, 4)

    # Case 1: shapes matching the module's implied use (input_dim=1, small batch).
    input_dim, n = 1, 8
    x = jax.random.normal(kx, (n, input_dim), dtype=jnp.float32)
    w = jax.random.uniform(kw, (input_dim + 1, 1), dtype=jnp.float32)  # torch.rand-style init
    y = my_linear_regression_forward(x, w)
    jax.block_until_ready(y)
    ones = jnp.ones((n, 1), jnp.float32)
    y_ref = jnp.concatenate([x, ones], axis=1) @ w
    assert y.shape == (n, 1)
    assert jnp.allclose(y, y_ref, atol=1e-5, rtol=1e-5), "case 1 mismatch vs reference"

    # Case 2: multi-tile grid (exercises padding + the pipelined BlockSpec path).
    input_dim2, n2 = 4, 3000
    x2 = jax.random.normal(kx2, (n2, input_dim2), dtype=jnp.float32)
    w2 = jax.random.uniform(kw2, (input_dim2 + 1, 1), dtype=jnp.float32)
    y2 = my_linear_regression_forward(x2, w2, tile_rows=8)
    jax.block_until_ready(y2)
    ones2 = jnp.ones((n2, 1), jnp.float32)
    y2_ref = jnp.concatenate([x2, ones2], axis=1) @ w2
    assert jnp.allclose(y2, y2_ref, atol=1e-5, rtol=1e-5), "case 2 mismatch vs reference"

    print("KERNEL_OK")
</pallas_src>

<mosaic_0001>
module attributes {stable_mosaic.version = 11 : i64} {
  func.func @_linreg_kernel(%arg0: i32, %arg1: memref<1x1x128xf32, #tpu.memory_space<vmem>>, %arg2: memref<2x1xf32, #tpu.memory_space<smem>>, %arg3: memref<1x128xf32, #tpu.memory_space<vmem>>) attributes {dimension_semantics = [#tpu.dimension_semantics<parallel>], iteration_bounds = array<i64: 1>, scalar_prefetch = 0 : i64, scratch_operands = 0 : i64, tpu.core_type = #tpu.core_type<tc>, window_params = [{transform_indices = @transform_0, window_bounds = array<i64: 1, 1, 128>}, {transform_indices = @transform_1, window_bounds = array<i64: 2, 1>}, {transform_indices = @transform_2, window_bounds = array<i64: 1, 128>}]} {
    %c0 = arith.constant 0 : index
    %c0_0 = arith.constant 0 : index
    %c0_1 = arith.constant 0 : index
    %0 = vector.load %arg1[%c0, %c0_0, %c0_1] : memref<1x1x128xf32, #tpu.memory_space<vmem>>, vector<1x1x128xf32>
    %1 = vector.shape_cast %0 : vector<1x1x128xf32> to vector<1x128xf32>
    %c0_2 = arith.constant 0 : index
    %c0_3 = arith.constant 0 : index
    %2 = memref.load %arg2[%c0_2, %c0_3] : memref<2x1xf32, #tpu.memory_space<smem>>
    %3 = vector.broadcast %2 : f32 to vector<1x128xf32>
    %4 = arith.mulf %1, %3 : vector<1x128xf32>
    %c1 = arith.constant 1 : index
    %c0_4 = arith.constant 0 : index
    %5 = memref.load %arg2[%c1, %c0_4] : memref<2x1xf32, #tpu.memory_space<smem>>
    %6 = vector.broadcast %5 : f32 to vector<1x128xf32>
    %7 = arith.addf %4, %6 : vector<1x128xf32>
    %c0_5 = arith.constant 0 : index
    %c0_6 = arith.constant 0 : index
    %8 = vector.load %arg3[%c0_5, %c0_6] : memref<1x128xf32, #tpu.memory_space<vmem>>, vector<1x128xf32>
    tpu.vector_store %arg3[%c0_5, %c0_6], %7 {strides = array<i32>} : memref<1x128xf32, #tpu.memory_space<vmem>>, vector<1x128xf32>,
    return
  }
  func.func @transform_0(%arg0: i32) -> (i32, i32, i32) {
    %c0_i32 = arith.constant 0 : i32
    %c0_i32_0 = arith.constant 0 : i32
    %c0_i32_1 = arith.constant 0 : i32
    return %c0_i32, %arg0, %c0_i32_0 : i32, i32, i32
  }
  func.func @transform_1(%arg0: i32) -> (i32, i32) {
    %c0_i32 = arith.constant 0 : i32
    %c0_i32_0 = arith.constant 0 : i32
    %c0_i32_1 = arith.constant 0 : i32
    return %c0_i32, %c0_i32_0 : i32, i32
  }
  func.func @transform_2(%arg0: i32) -> (i32, i32) {
    %c0_i32 = arith.constant 0 : i32
    %c0_i32_0 = arith.constant 0 : i32
    return %arg0, %c0_i32 : i32, i32
  }
}

</mosaic_0001>

<llo_original>
// kernel: tpu_custom_call.1
$region0: #{tpu_custom_call.1}
  #allocation0 [shape = 'u32[]', space=smem, size = 0x4, offset = 0x4, fixed_abs, tag = 'smem constant byte address 0x4 - core index']
  #allocation1 [shape = 'u32[144,128]{1,0:T(1,128)}', space=vmem, size = 0x12000, scoped, tag = 'internal scratch']
  %s0 = inlined_call_operand.vmem [shape: f32[1,1,128], index: 0, kind: input, shape index: {}]
  %s1 = inlined_call_operand.vmem [shape: f32[2,1], index: 1, kind: input, shape index: {}]
  %s2 = inlined_call_operand.hbm [shape: f32[1,128], index: 2, kind: output, shape index: {}]
  %s3 = sld [smem:[#allocation0]]
  $region22: #{tpu_custom_call.1} parent=0
    _
  %s5 = ssub.s32 1, %s3
  %s6 = scalar_select 0, %s5, %s3
  $region1: #{tpu_custom_call.1} parent=0
    #allocation2 [shape = 'u8[1024]{0}', space=smem, size = 0x400, scoped, tag = 'input window, operand 1, single buffered']
    #allocation3 [shape = 's32[1]{0}', space=sflag, size = 0x4, scoped, tag = 'scoped memory for tpu_custom_call.1']
    #allocation4 [shape = 's32[1]{0}', space=sflag, size = 0x4, scoped, tag = 'scoped memory for tpu_custom_call.1']
    #allocation5 [shape = 'u8[512]{0}', space=vmem, size = 0x400, scoped, tag = 'output window, operand 0, single buffered']
    %7 = vsyncpa [#allocation4], 0
    %8 = vsyncpa [#allocation3], 0
    // Predicated region
    $region2: #{tpu_custom_call.1} parent=1 // pred_check
      _
    $region3: #{tpu_custom_call.1} parent=1 // pred_check_branch
      %10 = sbr.rel (0) target = $region5
    $region4: #{tpu_custom_call.1} parent=1 // pred_region
      _
    $region5: #{tpu_custom_call.1} parent=1 // pred_fallthru
      _
    // Predicated region
    $region6: #{tpu_custom_call.1} parent=1 // pred_check
      _
    $region7: #{tpu_custom_call.1} parent=1 // pred_check_branch
      %12 = sbr.rel (0) target = $region9
    $region8: #{tpu_custom_call.1} parent=1 // pred_region
      %s14 = ssub.s32 32, 32
      %15 = vsyncadd [#allocation4], %s14
      %s17 = sshll.u32 %s1, 4
      %s18 = int_to_ptr.vmem [resolvable:$true] %s17
      %20 = dma.vmem_to_smem %s18, 32, [#allocation2], [#allocation4]
    $region9: #{tpu_custom_call.1} parent=1 // pred_fallthru
      _
    // Predicated region
    $region10: #{tpu_custom_call.1} parent=1 // pred_check
      _
    $region11: #{tpu_custom_call.1} parent=1 // pred_check_branch
      %22 = sbr.rel (0) target = $region13
    $region12: #{tpu_custom_call.1} parent=1 // pred_region
      %23 = dma.done [#allocation4], 32
    $region13: #{tpu_custom_call.1} parent=1 // pred_fallthru
      _
    %24 = sfence
    %v25 = vld [vmem:[%s0] sm:$0x1]
    %s26 = sld [smem:[#allocation2]]
    %v27 = vstv %s26
    %v28 = vmul.f32 %v25, %v27
    %s29 = sld [smem:[#allocation2 + $0x80]]
    %v30 = vstv %s29
    %v31 = vadd.f32 %v28, %v30
    %32 = vst [vmem:[#allocation5] sm:$0x1] %v31
    // Predicated region
    $region14: #{tpu_custom_call.1} parent=1 // pred_check
      _
    $region15: #{tpu_custom_call.1} parent=1 // pred_check_branch
      %34 = sbr.rel (0) target = $region17
    $region16: #{tpu_custom_call.1} parent=1 // pred_region
      %s36 = ssub.s32 16, 16
      %37 = vsyncadd [#allocation3], %s36
      %s39 = sshll.u32 [#allocation5], 4
      %s40 = int_to_ptr.vmem [resolvable:$true] %s39
      %42 = dma.vmem_to_hbm [thread:$0]  %s40, 16, %s2, [#allocation3]
    $region17: #{tpu_custom_call.1} parent=1 // pred_fallthru
      _
    // Predicated region
    $region18: #{tpu_custom_call.1} parent=1 // pred_check
      _
    $region19: #{tpu_custom_call.1} parent=1 // pred_check_branch
      %44 = sbr.rel (0) target = $region21
    $region20: #{tpu_custom_call.1} parent=1 // pred_region
      %45 = dma.done [#allocation3], 16
    $region21: #{tpu_custom_call.1} parent=1 // pred_fallthru
      _
    %46 = vsyncpa [#allocation3], 1
    %47 = vsyncpa [#allocation4], 1

</llo_original>
